<compile_context>
chip_gen: v5e
topology: v5e:2x2
jax: 0.10.0
libtpu: 0.0.40
codegen_flags: <defaults>
</compile_context>

<pallas_src>
import jax
import jax.numpy as jnp
from jax import lax
from jax.experimental import pallas as pl
from jax.experimental.pallas import tpu as pltpu  # noqa: F401  (imported per template)


# ---------------------------------------------------------------------------
# Kernel: fusion = x_cat @ W_cat ; ReLU ; logits = fusion @ w_gen^T ; sigmoid
# ---------------------------------------------------------------------------
def _ba_fused_kernel(x_ref, w_cat_ref, w_gen_ref, out_ref):
    # Single MXU pass for all branches + BN shift (bias-as-row).  (B, r), f32 acc.
    fusion = jnp.dot(x_ref[...], w_cat_ref[...],
                     preferred_element_type=jnp.float32)
    h = jnp.maximum(fusion, 0.0)                               # ReLU (f32 VPU)

    # Generation Linear with w_gen in native (C, r) layout: contract both on r.
    logits = lax.dot_general(
        h.astype(w_gen_ref.dtype), w_gen_ref[...],
        dimension_numbers=(((1,), (1,)), ((), ())),
        preferred_element_type=jnp.float32)                    # (B, C), f32

    # Sigmoid via EUP: exp + approximate reciprocal (keeps VALU slot clear).
    e = jnp.exp(-logits)
    out_ref[...] = pl.reciprocal(1.0 + e, approx=True).astype(out_ref.dtype)


# ---------------------------------------------------------------------------
# One-time (model-load) weight preparation — NOT on the per-call forward path.
# ---------------------------------------------------------------------------
def prepare_ba_params(params, eps=1e-5, compute_dtype=jnp.float32):
    """Fold eval-mode BatchNorm1d into each bias-free Linear, concat branches.

    params: {"branches": [(W (r,C_in), gamma, beta, running_mean, running_var),
                          ... one per pre layer, then one for cur_layer],
             "w_gen": (C, r) generation Linear weight}
    Returns {"w_cat": (sum C_in + 1, r), "w_gen": (C, r)} in `compute_dtype`.
    """
    r = params["w_gen"].shape[1]
    folded = []
    total_shift = jnp.zeros((r,), jnp.float32)
    for (W, gamma, beta, mu, var) in params["branches"]:
        scale = gamma * lax.rsqrt(var + eps)                   # (r,)
        shift = beta - mu * scale                              # (r,)
        folded.append(W.T.astype(jnp.float32) * scale[None, :])  # (C_in, r)
        total_shift = total_shift + shift
    # Bias-as-row: last row of W_cat pairs with a ones-column in x_cat.
    w_cat = jnp.concatenate(folded + [total_shift[None, :]], axis=0)  # (K+1, r)
    return {
        "w_cat": jax.device_put(w_cat.astype(compute_dtype)),
        "w_gen": jax.device_put(params["w_gen"].astype(compute_dtype)),  # native (C, r)
    }


# ---------------------------------------------------------------------------
# Forward pass (per-call work: reshapes + one tiny concat, then one pallas_call)
# ---------------------------------------------------------------------------
@jax.jit
def ba_module_forward(pre_layers, cur_layer, prepared):
    b = cur_layer.shape[0]
    C = cur_layer.shape[1]
    w_cat = prepared["w_cat"]                                   # (K+1, r)
    w_gen = prepared["w_gen"]                                   # (C, r)
    r = w_cat.shape[1]
    dt = w_cat.dtype

    # Free metadata reshapes + one tiny (B, K+1) activation concat (bias column).
    xs = [p.reshape(b, -1).astype(dt) for p in pre_layers]
    xs.append(cur_layer.reshape(b, -1).astype(dt))
    x_cat = jnp.concatenate(xs + [jnp.ones((b, 1), dt)], axis=1)  # (B, K+1)
    k1 = x_cat.shape[1]
    assert k1 == w_cat.shape[0]

    itemsize = jnp.dtype(dt).itemsize
    cost = pl.CostEstimate(
        flops=2 * b * k1 * r + 2 * b * r * C,
        transcendentals=2 * b * C,                              # exp + recip
        bytes_accessed=(x_cat.size + w_cat.size + w_gen.size) * itemsize + b * C * 4,
    )

    att = pl.pallas_call(
        _ba_fused_kernel,
        out_shape=jax.ShapeDtypeStruct((b, C), jnp.float32),
        in_specs=[
            pl.BlockSpec(x_cat.shape, lambda: (0, 0)),
            pl.BlockSpec(w_cat.shape, lambda: (0, 0)),
            pl.BlockSpec(w_gen.shape, lambda: (0, 0)),
        ],
        out_specs=pl.BlockSpec((b, C), lambda: (0, 0)),
        cost_estimate=cost,
    )(x_cat, w_cat, w_gen)

    return att.reshape(b, C, 1, 1)


# ---------------------------------------------------------------------------
# Pure-JAX reference mirroring the PyTorch module in eval() mode.
# ---------------------------------------------------------------------------
def _ba_module_ref(pre_layers, cur_layer, params, eps=1e-5):
    b = cur_layer.shape[0]
    C = cur_layer.shape[1]
    xs = [p.reshape(b, -1) for p in pre_layers] + [cur_layer.reshape(b, -1)]
    fusion = 0.0
    for x, (W, gamma, beta, mu, var) in zip(xs, params["branches"]):
        y = x @ W.T                                             # Linear(bias=False)
        y = (y - mu) * lax.rsqrt(var + eps) * gamma + beta      # BatchNorm1d (eval)
        fusion = fusion + y
    h = jnp.maximum(fusion, 0.0)                                # ReLU
    att = 1.0 / (1.0 + jnp.exp(-(h @ params["w_gen"].T)))       # Linear + Sigmoid
    return att.reshape(b, C, 1, 1)


if __name__ == "__main__":
    key = jax.random.PRNGKey(0)
    kit = iter(jax.random.split(key, 32))

    B = 4
    pre_channels = (32, 64)
    cur_channel = 128
    reduction = 16
    r = cur_channel // reduction                                # 8

    # Inputs: global-pooled feature maps (spatial 1x1, as the Linear implies).
    pre_layers = [
        jax.random.normal(next(kit), (B, c, 1, 1), jnp.float32)
        for c in pre_channels
    ]
    cur_layer = jax.random.normal(next(kit), (B, cur_channel, 1, 1), jnp.float32)

    def make_branch(c_in):
        W = 0.05 * jax.random.normal(next(kit), (r, c_in), jnp.float32)
        gamma = jax.random.uniform(next(kit), (r,), jnp.float32, 0.5, 1.5)
        beta = 0.1 * jax.random.normal(next(kit), (r,), jnp.float32)
        mu = 0.1 * jax.random.normal(next(kit), (r,), jnp.float32)
        var = jax.random.uniform(next(kit), (r,), jnp.float32, 0.5, 1.5)
        return (W, gamma, beta, mu, var)

    branches = [make_branch(c) for c in pre_channels] + [make_branch(cur_channel)]
    w_gen = 0.05 * jax.random.normal(next(kit), (cur_channel, r), jnp.float32)
    params = {"branches": branches, "w_gen": w_gen}

    ref = _ba_module_ref(pre_layers, cur_layer, params)

    # --- f32 path (default) -------------------------------------------------
    prepared_f32 = prepare_ba_params(params, compute_dtype=jnp.float32)
    out = jax.block_until_ready(ba_module_forward(pre_layers, cur_layer, prepared_f32))
    assert out.shape == (B, cur_channel, 1, 1) and out.dtype == jnp.float32
    # Tolerance covers MXU f32-via-bf16 passes + approx-reciprocal sigmoid.
    assert jnp.allclose(out, ref, atol=1e-2, rtol=0.0), float(
        jnp.max(jnp.abs(out - ref)))

    # --- bf16 path (single-pass MXU on v6e/v7x; f32 accumulate + epilogue) ---
    prepared_bf16 = prepare_ba_params(params, compute_dtype=jnp.bfloat16)
    out_bf16 = jax.block_until_ready(
        ba_module_forward(pre_layers, cur_layer, prepared_bf16))
    assert out_bf16.shape == (B, cur_channel, 1, 1)
    assert jnp.allclose(out_bf16, ref, atol=3e-2, rtol=0.0), float(
        jnp.max(jnp.abs(out_bf16 - ref)))

    print("KERNEL_OK")
</pallas_src>

<mosaic_0001>
module attributes {stable_mosaic.version = 11 : i64} {
  func.func @_ba_fused_kernel(%arg0: memref<4x225xf32, #tpu.memory_space<vmem>>, %arg1: memref<225x8xf32, #tpu.memory_space<vmem>>, %arg2: memref<128x8xf32, #tpu.memory_space<vmem>>, %arg3: memref<4x128xf32, #tpu.memory_space<vmem>>) attributes {dimension_semantics = [], scalar_prefetch = 0 : i64, scratch_operands = 0 : i64, tpu.core_type = #tpu.core_type<tc>} {
    %c0 = arith.constant 0 : index
    %c0_0 = arith.constant 0 : index
    %0 = vector.load %arg0[%c0, %c0_0] : memref<4x225xf32, #tpu.memory_space<vmem>>, vector<4x225xf32>
    %c0_1 = arith.constant 0 : index
    %c0_2 = arith.constant 0 : index
    %1 = vector.load %arg1[%c0_1, %c0_2] : memref<225x8xf32, #tpu.memory_space<vmem>>, vector<225x8xf32>
    %cst = arith.constant dense<0.000000e+00> : vector<4x8xf32>
    %2 = tpu.matmul %0, %1, %cst {dimension_numbers = #tpu.dot_dimension_numbers<[1], [0], [0], [1], [0, 0, 1, 1], [], []>} : vector<4x225xf32>, vector<225x8xf32>, vector<4x8xf32> -> vector<4x8xf32>
    %cst_3 = arith.constant 0.000000e+00 : f32
    %3 = vector.broadcast %cst_3 : f32 to vector<4x8xf32>
    %4 = arith.maximumf %2, %3 : vector<4x8xf32>
    %c0_4 = arith.constant 0 : index
    %c0_5 = arith.constant 0 : index
    %5 = vector.load %arg2[%c0_4, %c0_5] : memref<128x8xf32, #tpu.memory_space<vmem>>, vector<128x8xf32>
    %cst_6 = arith.constant dense<0.000000e+00> : vector<4x128xf32>
    %6 = tpu.matmul %4, %5, %cst_6 {dimension_numbers = #tpu.dot_dimension_numbers<[1], [1], [0], [0], [0, 0, 1, 0], [], []>} : vector<4x8xf32>, vector<128x8xf32>, vector<4x128xf32> -> vector<4x128xf32>
    %cst_7 = arith.constant 0.000000e+00 : f32
    %7 = vector.broadcast %cst_7 : f32 to vector<4x128xf32>
    %8 = arith.subf %7, %6 : vector<4x128xf32>
    %9 = math.exp %8 : vector<4x128xf32>
    %cst_8 = arith.constant 1.000000e+00 : f32
    %10 = vector.broadcast %cst_8 : f32 to vector<4x128xf32>
    %11 = arith.addf %10, %9 : vector<4x128xf32>
    %12 = tpu.reciprocal %11 {approx = true} : vector<4x128xf32> -> vector<4x128xf32>
    %c0_9 = arith.constant 0 : index
    %c0_10 = arith.constant 0 : index
    %13 = vector.load %arg3[%c0_9, %c0_10] : memref<4x128xf32, #tpu.memory_space<vmem>>, vector<4x128xf32>
    tpu.vector_store %arg3[%c0_9, %c0_10], %12 {strides = array<i32>} : memref<4x128xf32, #tpu.memory_space<vmem>>, vector<4x128xf32>,
    return
  }
}

</mosaic_0001>

<llo_original>
// kernel: ba_module_forward.1
$region0: #{ba_module_forward.1}
  #allocation0 [shape = 'u32[]', space=smem, size = 0x4, offset = 0x4, fixed_abs, tag = 'smem constant byte address 0x4 - core index']
  #allocation1 [shape = 'u32[72,128]{1,0:T(1,128)}', space=vmem, size = 0x9000, scoped, tag = 'internal scratch']
  %s0 = inlined_call_operand.vmem [shape: f32[4,225], index: 0, kind: input, shape index: {}]
  %s1 = inlined_call_operand.vmem [shape: f32[225,8], index: 1, kind: input, shape index: {}]
  %s2 = inlined_call_operand.vmem [shape: f32[128,8], index: 2, kind: input, shape index: {}]
  %s3 = inlined_call_operand.hbm [shape: f32[4,128], index: 3, kind: output, shape index: {}]
  %s4 = sld [smem:[#allocation0]]
  $region22: #{ba_module_forward.1} parent=0
    _
  %s6 = ssub.s32 1, %s4
  %s7 = scalar_select 0, %s6, %s4
  $region1: #{ba_module_forward.1} parent=0
    #allocation2 [shape = 'u8[2048]{0}', space=vmem, size = 0x800, scoped, tag = 'output window, operand 0, single buffered']
    #allocation3 [shape = 's32[1]{0}', space=sflag, size = 0x4, scoped, tag = 'scoped memory for ba_module_forward.1']
    %8 = vsyncpa [#allocation3], 0
    // Predicated region
    $region2: #{ba_module_forward.1} parent=1 // pred_check
      _
    $region3: #{ba_module_forward.1} parent=1 // pred_check_branch
      %10 = sbr.rel (0) target = $region5
    $region4: #{ba_module_forward.1} parent=1 // pred_region
      _
    $region5: #{ba_module_forward.1} parent=1 // pred_fallthru
      _
    // Predicated region
    $region6: #{ba_module_forward.1} parent=1 // pred_check
      _
    $region7: #{ba_module_forward.1} parent=1 // pred_check_branch
      %12 = sbr.rel (0) target = $region9
    $region8: #{ba_module_forward.1} parent=1 // pred_region
      _
    $region9: #{ba_module_forward.1} parent=1 // pred_fallthru
      _
    // Predicated region
    $region10: #{ba_module_forward.1} parent=1 // pred_check
      _
    $region11: #{ba_module_forward.1} parent=1 // pred_check_branch
      %14 = sbr.rel (0) target = $region13
    $region12: #{ba_module_forward.1} parent=1 // pred_region
      _
    $region13: #{ba_module_forward.1} parent=1 // pred_fallthru
      _
    %v15 = vld [vmem:[%s0] sm:$0xff]
    %v16 = vld [vmem:[%s1] sm:$0xff]
    %v17 = vld [vmem:[%s1 + $0x8] sm:$0xff]
    %v18 = vld [vmem:[%s1 + $0x10] sm:$0xff]
    %v19 = vld [vmem:[%s1 + $0x18] sm:$0xff]
    %v20 = vld [vmem:[%s1 + $0x20] sm:$0xff]
    %v21 = vld [vmem:[%s1 + $0x28] sm:$0xff]
    %v22 = vld [vmem:[%s1 + $0x30] sm:$0xff]
    %v23 = vld [vmem:[%s1 + $0x38] sm:$0xff]
    %v24 = vld [vmem:[%s1 + $0x40] sm:$0xff]
    %v25 = vld [vmem:[%s1 + $0x48] sm:$0xff]
    %v26 = vld [vmem:[%s1 + $0x50] sm:$0xff]
    %v27 = vld [vmem:[%s1 + $0x58] sm:$0xff]
    %v28 = vld [vmem:[%s1 + $0x60] sm:$0xff]
    %v29 = vld [vmem:[%s1 + $0x68] sm:$0xff]
    %v30 = vld [vmem:[%s1 + $0x70] sm:$0xff]
    %v31 = vld [vmem:[%s1 + $0x78] sm:$0xff]
    %v32 = vld [vmem:[%s1 + $0x80] sm:$0xff]
    %v33 = vld [vmem:[%s1 + $0x88] sm:$0xff]
    %v34 = vld [vmem:[%s1 + $0x90] sm:$0xff]
    %v35 = vld [vmem:[%s1 + $0x98] sm:$0xff]
    %v36 = vld [vmem:[%s1 + $0xa0] sm:$0xff]
    %v37 = vld [vmem:[%s1 + $0xa8] sm:$0xff]
    %v38 = vld [vmem:[%s1 + $0xb0] sm:$0xff]
    %v39 = vld [vmem:[%s1 + $0xb8] sm:$0xff]
    %v40 = vld [vmem:[%s1 + $0xc0] sm:$0xff]
    %v41 = vld [vmem:[%s1 + $0xc8] sm:$0xff]
    %v42 = vld [vmem:[%s1 + $0xd0] sm:$0xff]
    %v43 = vld [vmem:[%s1 + $0xd8] sm:$0xff]
    %v44 = vld [vmem:[%s1 + $0xe0] sm:$0x1]
    %46 = vst [vmem:[#allocation1] ss:$2 sm:$0xff] %v15
    %v47 = vld.sshfl [vmem:[#allocation1] sm:$0xff pattern:$0x75316420]
    %v48 = vld.sshfl [vmem:[#allocation1 + $0x8] sm:$0xff pattern:$0x75316420]
    %vm50 = vcmask 793600
    %v51 = vsel %vm50, %v48, 0
    %vm53 = vcmask 1040384
    %v55 = vsel %vm53, %v44, 0
    %57 = vmatpush.msra.mxu0 %v31
    %58 = vmatpush.msra.mxu0 %v30
    %59 = vmatpush.msra.mxu0 %v29
    %60 = vmatpush.msra.mxu0 %v28
    %61 = vmatpush.msra.mxu0 %v27
    %62 = vmatpush.msra.mxu0 %v26
    %63 = vmatpush.msra.mxu0 %v25
    %64 = vmatpush.msra.mxu0 %v24
    %65 = vmatpush.msra.mxu0 %v23
    %66 = vmatpush.msra.mxu0 %v22
    %67 = vmatpush.msra.mxu0 %v21
    %68 = vmatpush.msra.mxu0 %v20
    %69 = vmatpush.msra.mxu0 %v19
    %70 = vmatpush.msra.mxu0 %v18
    %71 = vmatpush.msra.mxu0 %v17
    %72 = vmatpush.msra.mxu0 %v16
    %73 = vmatmul.f32.gmra.mxu0 %v47
    %v74 = vpop.f32.mrf.mxu0
    %v75 = vadd.f32 0.0, %v74
    %76 = vdwg.mxu0
    %77 = vmatpush.msra.mxu0 0.0
    %78 = vmatpush.msra.mxu0 0.0
    %79 = vmatpush.msra.mxu0 0.0
    %80 = vmatpush.msra.mxu0 %v55
    %81 = vmatpush.msra.mxu0 %v43
    %82 = vmatpush.msra.mxu0 %v42
    %83 = vmatpush.msra.mxu0 %v41
    %84 = vmatpush.msra.mxu0 %v40
    %85 = vmatpush.msra.mxu0 %v39
    %86 = vmatpush.msra.mxu0 %v38
    %87 = vmatpush.msra.mxu0 %v37
    %88 = vmatpush.msra.mxu0 %v36
    %89 = vmatpush.msra.mxu0 %v35
    %90 = vmatpush.msra.mxu0 %v34
    %91 = vmatpush.msra.mxu0 %v33
    %92 = vmatpush.msra.mxu0 %v32
    %93 = vmatmul.f32.gmra.mxu0 %v51
    %v94 = vpop.f32.mrf.mxu0
    %v95 = vadd.f32 %v75, %v94
    %96 = vdwg.mxu0
    %v97 = vmax.f32 %v95, 0.0
    %v98 = vld [vmem:[%s2] sm:$0xff]
    %v99 = vld [vmem:[%s2 + $0x8] sm:$0xff]
    %v100 = vld [vmem:[%s2 + $0x10] sm:$0xff]
    %v101 = vld [vmem:[%s2 + $0x18] sm:$0xff]
    %v102 = vld [vmem:[%s2 + $0x20] sm:$0xff]
    %v103 = vld [vmem:[%s2 + $0x28] sm:$0xff]
    %v104 = vld [vmem:[%s2 + $0x30] sm:$0xff]
    %v105 = vld [vmem:[%s2 + $0x38] sm:$0xff]
    %v106 = vld [vmem:[%s2 + $0x40] sm:$0xff]
    %v107 = vld [vmem:[%s2 + $0x48] sm:$0xff]
    %v108 = vld [vmem:[%s2 + $0x50] sm:$0xff]
    %v109 = vld [vmem:[%s2 + $0x58] sm:$0xff]
    %v110 = vld [vmem:[%s2 + $0x60] sm:$0xff]
    %v111 = vld [vmem:[%s2 + $0x68] sm:$0xff]
    %v112 = vld [vmem:[%s2 + $0x70] sm:$0xff]
    %v113 = vld [vmem:[%s2 + $0x78] sm:$0xff]
    %vm114 = vcmask 64512
    %v116 = vsel %vm114, %v97, 0
    %v119 = vsel %vm114, %v98, 0
    %v122 = vsel %vm114, %v99, 0
    %v125 = vsel %vm114, %v100, 0
    %v128 = vsel %vm114, %v101, 0
    %v131 = vsel %vm114, %v102, 0
    %v134 = vsel %vm114, %v103, 0
    %v137 = vsel %vm114, %v104, 0
    %v140 = vsel %vm114, %v105, 0
    %v143 = vsel %vm114, %v106, 0
    %v146 = vsel %vm114, %v107, 0
    %v149 = vsel %vm114, %v108, 0
    %v152 = vsel %vm114, %v109, 0
    %v155 = vsel %vm114, %v110, 0
    %v158 = vsel %vm114, %v111, 0
    %v161 = vsel %vm114, %v112, 0
    %v164 = vsel %vm114, %v113, 0
    %166 = vmatpush.xpose.msra.mxu0 %v164
    %167 = vmatpush.xpose.msra.mxu0 %v161
    %168 = vmatpush.xpose.msra.mxu0 %v158
    %169 = vmatpush.xpose.msra.mxu0 %v155
    %170 = vmatpush.xpose.msra.mxu0 %v152
    %171 = vmatpush.xpose.msra.mxu0 %v149
    %172 = vmatpush.xpose.msra.mxu0 %v146
    %173 = vmatpush.xpose.msra.mxu0 %v143
    %174 = vmatpush.xpose.msra.mxu0 %v140
    %175 = vmatpush.xpose.msra.mxu0 %v137
    %176 = vmatpush.xpose.msra.mxu0 %v134
    %177 = vmatpush.xpose.msra.mxu0 %v131
    %178 = vmatpush.xpose.msra.mxu0 %v128
    %179 = vmatpush.xpose.msra.mxu0 %v125
    %180 = vmatpush.xpose.msra.mxu0 %v122
    %181 = vmatpush.xpose.msra.mxu0 %v119
    %182 = vmatmul.f32.gmra.mxu0 %v116
    %v183 = vpop.f32.mrf.mxu0
    %v184 = vadd.f32 0.0, %v183
    %185 = vdwg.mxu0
    %v186 = vsub.f32 0.0, %v184
    %v187 = vmul.f32 %v186, 1.442695
    %v188 = vpow.pop %v187
    %v189 = vadd.f32 %v188, 1.0
    %v190 = vrcp.pop %v189
    %191 = vst [vmem:[#allocation2] sm:$0xf] %v190
    // Predicated region
    $region14: #{ba_module_forward.1} parent=1 // pred_check
      _
    $region15: #{ba_module_forward.1} parent=1 // pred_check_branch
      %193 = sbr.rel (0) target = $region17
    $region16: #{ba_module_forward.1} parent=1 // pred_region
      %195 = vsyncadd [#allocation3], 0
      %s197 = sshll.u32 [#allocation2], 4
      %s198 = int_to_ptr.vmem [resolvable:$true] %s197
      %s199 = sshll.u32 %s3, 4
      %s200 = int_to_ptr.hbm [resolvable:$true] %s199
      %202 = dma.vmem_to_hbm [thread:$0]  %s198, 64, %s200, [#allocation3]
    $region17: #{ba_module_forward.1} parent=1 // pred_fallthru
      _
    // Predicated region
    $region18: #{ba_module_forward.1} parent=1 // pred_check
      _
    $region19: #{ba_module_forward.1} parent=1 // pred_check_branch
      %204 = sbr.rel (0) target = $region21
    $region20: #{ba_module_forward.1} parent=1 // pred_region
      %206 = dma.done [#allocation3], 64
    $region21: #{ba_module_forward.1} parent=1 // pred_fallthru
      _
    %207 = vsyncpa [#allocation3], 1

</llo_original>
